<compile_context>
chip_gen: v7x
topology: tpu7x:2x2x1
jax: 0.10.0
libtpu: 0.0.40
codegen_flags: <defaults>
</compile_context>

<pallas_src>
import jax
import jax.numpy as jnp
from jax import lax
from jax.experimental import pallas as pl
from jax.experimental.pallas import tpu as pltpu


def _linear_bin_kernel(thr_ref, x_ref, w_ref, b_ref, o_ref, acc_ref):
    # thr_ref: SMEM (1,1) scalar threshold
    # x_ref:   (tm, tk) activation tile
    # w_ref:   (tn, tk) weight tile (torch.nn.Linear layout: (out, in))
    # b_ref:   (1, tn)  bias tile
    # o_ref:   (tm, tn) output tile
    # acc_ref: (tm, tn) f32 accumulator scratch (resident across the K axis)
    k = pl.program_id(2)

    @pl.when(k == 0)
    def _():
        acc_ref[...] = jnp.zeros_like(acc_ref)

    t = thr_ref[0, 0]
    w = w_ref[...]
    # binarize101: {-1, 0, +1} with dead-zone (-t, t); two compares + selects (VPU).
    xdt = x_ref.dtype
    one = jnp.ones((), dtype=xdt)
    neg_one = -jnp.ones((), dtype=xdt)
    zero = jnp.zeros((), dtype=xdt)
    wb = jnp.where(w > t, one, jnp.where(w < -t, neg_one, zero))

    # Contract on K for both operands: (tm, tk) x (tn, tk) -> (tm, tn).
    # No explicit transpose of the weight tile.
    acc_ref[...] += lax.dot_general(
        x_ref[...], wb,
        dimension_numbers=(((1,), (1,)), ((), ())),
        preferred_element_type=jnp.float32,
    )

    @pl.when(k == pl.num_programs(2) - 1)
    def _():
        o_ref[...] = (acc_ref[...] + b_ref[...].astype(jnp.float32)).astype(o_ref.dtype)


def _round_up(v, m):
    return (v + m - 1) // m * m


def linear_bin(x, weight, bias=None, threshold=0.0, *, tm=256, tn=512, tk=512):
    """x: (M, K), weight: (N, K), bias: (N,) or None, threshold: float.

    Returns x @ binarize101(weight, threshold).T + bias, shape (M, N).
    """
    M, K = x.shape
    N, K2 = weight.shape
    assert K == K2, "in_features mismatch"
    if bias is None:
        bias = jnp.zeros((N,), dtype=x.dtype)

    # Clamp tile sizes to the (padded) problem so small shapes use one block per
    # axis while keeping TPU layout constraints: tm multiple of 8, tn/tk multiples
    # of 128 (lane-dense output / aligned K).
    tm = min(tm, _round_up(M, 8))
    tn = min(tn, _round_up(N, 128))
    tk = min(tk, _round_up(K, 128))

    Mp, Np, Kp = _round_up(M, tm), _round_up(N, tn), _round_up(K, tk)

    x_p = x if (Mp == M and Kp == K) else jnp.pad(x, ((0, Mp - M), (0, Kp - K)))
    w_p = weight if (Np == N and Kp == K) else jnp.pad(weight, ((0, Np - N), (0, Kp - K)))
    b_p = bias if Np == N else jnp.pad(bias, (0, Np - N))
    b2d = b_p.reshape(1, Np).astype(x.dtype)
    thr = jnp.full((1, 1), threshold, dtype=weight.dtype)

    grid = (Mp // tm, Np // tn, Kp // tk)
    itemsize = jnp.dtype(x.dtype).itemsize

    out = pl.pallas_call(
        _linear_bin_kernel,
        out_shape=jax.ShapeDtypeStruct((Mp, Np), x.dtype),
        grid_spec=pltpu.PrefetchScalarGridSpec(
            num_scalar_prefetch=0,
            grid=grid,
            in_specs=[
                # threshold scalar lives in SMEM, untiled (read once per step).
                pl.BlockSpec(memory_space=pltpu.MemorySpace.SMEM),
                pl.BlockSpec((tm, tk), lambda i, j, k: (i, k)),   # x tile
                pl.BlockSpec((tn, tk), lambda i, j, k: (j, k)),   # weight tile
                pl.BlockSpec((1, tn), lambda i, j, k: (0, j)),    # bias tile
            ],
            out_specs=pl.BlockSpec((tm, tn), lambda i, j, k: (i, j)),
            scratch_shapes=[pltpu.VMEM((tm, tn), jnp.float32)],
        ),
        compiler_params=pltpu.CompilerParams(
            dimension_semantics=("parallel", "parallel", "arbitrary"),
        ),
        cost_estimate=pl.CostEstimate(
            flops=2 * Mp * Np * Kp,
            transcendentals=0,
            bytes_accessed=(Mp * Kp + Np * Kp + Mp * Np + Np) * itemsize,
        ),
    )(thr, x_p, w_p, b2d)

    if Mp == M and Np == N:
        return out
    return out[:M, :N]


if __name__ == "__main__":
    key = jax.random.PRNGKey(0)
    kx, kw, kb = jax.random.split(key, 3)

    batch, in_features, out_features = 8, 32, 16
    threshold = 0.1

    x = jax.random.normal(kx, (batch, in_features), dtype=jnp.float32)
    weight = jax.random.normal(kw, (out_features, in_features), dtype=jnp.float32)
    bias = jax.random.normal(kb, (out_features,), dtype=jnp.float32)

    y = linear_bin(x, weight, bias, threshold)
    jax.block_until_ready(y)

    # Pure-JAX reference check
    wb_ref = jnp.where(weight > threshold, 1.0,
                       jnp.where(weight < -threshold, -1.0, 0.0)).astype(weight.dtype)
    y_ref = x @ wb_ref.T + bias
    assert y.shape == y_ref.shape, "shape mismatch vs reference"
    assert jnp.allclose(y, y_ref, atol=1e-5, rtol=1e-5), "mismatch vs reference"

    print("KERNEL_OK")
</pallas_src>

<mosaic_0001>
module attributes {stable_mosaic.version = 11 : i64} {
  func.func @_linear_bin_kernel(%arg0: i32, %arg1: i32, %arg2: i32, %arg3: memref<1x1xf32, #tpu.memory_space<smem>>, %arg4: memref<8x128xf32, #tpu.memory_space<vmem>>, %arg5: memref<128x128xf32, #tpu.memory_space<vmem>>, %arg6: memref<1x128xf32, #tpu.memory_space<vmem>>, %arg7: memref<8x128xf32, #tpu.memory_space<vmem>>, %arg8: memref<8x128xf32, #tpu.memory_space<vmem>>) attributes {dimension_semantics = [#tpu.dimension_semantics<parallel>, #tpu.dimension_semantics<parallel>, #tpu.dimension_semantics<arbitrary>], iteration_bounds = array<i64: 1, 1, 1>, scalar_prefetch = 0 : i64, scratch_operands = 1 : i64, tpu.core_type = #tpu.core_type<tc>, window_params = [{transform_indices = @transform_0, window_bounds = array<i64: 1, 1>}, {transform_indices = @transform_1, window_bounds = array<i64: 8, 128>}, {transform_indices = @transform_2, window_bounds = array<i64: 128, 128>}, {transform_indices = @transform_3, window_bounds = array<i64: 1, 128>}, {transform_indices = @transform_4, window_bounds = array<i64: 8, 128>}]} {
    %c0_i32 = arith.constant 0 : i32
    %0 = arith.cmpi eq, %arg2, %c0_i32 : i32
    %1 = arith.extui %0 : i1 to i32
    %c0_i32_0 = arith.constant 0 : i32
    %2 = arith.cmpi ne, %1, %c0_i32_0 : i32
    scf.if %2 {
      %cst_17 = arith.constant 0.000000e+00 : f32
      %24 = vector.broadcast %cst_17 : f32 to vector<8x128xf32>
      %c0_18 = arith.constant 0 : index
      %c0_19 = arith.constant 0 : index
      %25 = vector.load %arg8[%c0_18, %c0_19] : memref<8x128xf32, #tpu.memory_space<vmem>>, vector<8x128xf32>
      tpu.vector_store %arg8[%c0_18, %c0_19], %24 {strides = array<i32>} : memref<8x128xf32, #tpu.memory_space<vmem>>, vector<8x128xf32>,
    } else {
    }
    %c0 = arith.constant 0 : index
    %c0_1 = arith.constant 0 : index
    %3 = memref.load %arg3[%c0, %c0_1] : memref<1x1xf32, #tpu.memory_space<smem>>
    %c0_2 = arith.constant 0 : index
    %c0_3 = arith.constant 0 : index
    %4 = vector.load %arg5[%c0_2, %c0_3] : memref<128x128xf32, #tpu.memory_space<vmem>>, vector<128x128xf32>
    %cst = arith.constant 0.000000e+00 : f32
    %cst_4 = arith.constant 1.000000e+00 : f32
    %5 = arith.subf %cst, %cst_4 : f32
    %6 = vector.broadcast %3 : f32 to vector<128x128xf32>
    %7 = arith.cmpf ogt, %4, %6 : vector<128x128xf32>
    %cst_5 = arith.constant 0.000000e+00 : f32
    %8 = arith.subf %cst_5, %3 : f32
    %9 = vector.broadcast %8 : f32 to vector<128x128xf32>
    %10 = arith.cmpf olt, %4, %9 : vector<128x128xf32>
    %cst_6 = arith.constant 0.000000e+00 : f32
    %11 = vector.broadcast %5 : f32 to vector<128x128xf32>
    %12 = vector.broadcast %cst_6 : f32 to vector<128x128xf32>
    %13 = arith.select %10, %11, %12 : vector<128x128xi1>, vector<128x128xf32>
    %cst_7 = arith.constant 1.000000e+00 : f32
    %14 = vector.broadcast %cst_7 : f32 to vector<128x128xf32>
    %15 = arith.select %7, %14, %13 : vector<128x128xi1>, vector<128x128xf32>
    %c0_8 = arith.constant 0 : index
    %c0_9 = arith.constant 0 : index
    %16 = vector.load %arg8[%c0_8, %c0_9] : memref<8x128xf32, #tpu.memory_space<vmem>>, vector<8x128xf32>
    %c0_10 = arith.constant 0 : index
    %c0_11 = arith.constant 0 : index
    %17 = vector.load %arg4[%c0_10, %c0_11] : memref<8x128xf32, #tpu.memory_space<vmem>>, vector<8x128xf32>
    %cst_12 = arith.constant dense<0.000000e+00> : vector<8x128xf32>
    %18 = tpu.matmul %17, %15, %cst_12 {dimension_numbers = #tpu.dot_dimension_numbers<[1], [1], [0], [0], [0, 0, 1, 0], [], []>} : vector<8x128xf32>, vector<128x128xf32>, vector<8x128xf32> -> vector<8x128xf32>
    %19 = arith.addf %16, %18 : vector<8x128xf32>
    %c0_13 = arith.constant 0 : index
    %c0_14 = arith.constant 0 : index
    %20 = vector.load %arg8[%c0_13, %c0_14] : memref<8x128xf32, #tpu.memory_space<vmem>>, vector<8x128xf32>
    tpu.vector_store %arg8[%c0_13, %c0_14], %19 {strides = array<i32>} : memref<8x128xf32, #tpu.memory_space<vmem>>, vector<8x128xf32>,
    %c0_i32_15 = arith.constant 0 : i32
    %21 = arith.cmpi eq, %arg2, %c0_i32_15 : i32
    %22 = arith.extui %21 : i1 to i32
    %c0_i32_16 = arith.constant 0 : i32
    %23 = arith.cmpi ne, %22, %c0_i32_16 : i32
    scf.if %23 {
      %c0_17 = arith.constant 0 : index
      %c0_18 = arith.constant 0 : index
      %24 = vector.load %arg8[%c0_17, %c0_18] : memref<8x128xf32, #tpu.memory_space<vmem>>, vector<8x128xf32>
      %c0_19 = arith.constant 0 : index
      %c0_20 = arith.constant 0 : index
      %25 = vector.load %arg6[%c0_19, %c0_20] : memref<1x128xf32, #tpu.memory_space<vmem>>, vector<1x128xf32>
      %26 = vector.broadcast %25 : vector<1x128xf32> to vector<8x128xf32>
      %27 = arith.addf %24, %26 : vector<8x128xf32>
      %c0_21 = arith.constant 0 : index
      %c0_22 = arith.constant 0 : index
      %28 = vector.load %arg7[%c0_21, %c0_22] : memref<8x128xf32, #tpu.memory_space<vmem>>, vector<8x128xf32>
      tpu.vector_store %arg7[%c0_21, %c0_22], %27 {strides = array<i32>} : memref<8x128xf32, #tpu.memory_space<vmem>>, vector<8x128xf32>,
    } else {
    }
    return
  }
  func.func @transform_0(%arg0: i32, %arg1: i32, %arg2: i32) -> (i32, i32) {
    %c0_i32 = arith.constant 0 : i32
    %c0_i32_0 = arith.constant 0 : i32
    %c0_i32_1 = arith.constant 0 : i32
    return %c0_i32, %c0_i32_0 : i32, i32
  }
  func.func @transform_1(%arg0: i32, %arg1: i32, %arg2: i32) -> (i32, i32) {
    %c0_i32 = arith.constant 0 : i32
    return %arg0, %arg2 : i32, i32
  }
  func.func @transform_2(%arg0: i32, %arg1: i32, %arg2: i32) -> (i32, i32) {
    %c0_i32 = arith.constant 0 : i32
    return %arg1, %arg2 : i32, i32
  }
  func.func @transform_3(%arg0: i32, %arg1: i32, %arg2: i32) -> (i32, i32) {
    %c0_i32 = arith.constant 0 : i32
    %c0_i32_0 = arith.constant 0 : i32
    return %c0_i32, %arg1 : i32, i32
  }
  func.func @transform_4(%arg0: i32, %arg1: i32, %arg2: i32) -> (i32, i32) {
    %c0_i32 = arith.constant 0 : i32
    return %arg0, %arg1 : i32, i32
  }
}

</mosaic_0001>

<llo_original>
// kernel: tpu_custom_call.1
$region0: #{tpu_custom_call.1}
  #allocation0 [shape = 'u32[]', space=smem, size = 0x4, offset = 0x4, fixed_abs, tag = 'smem constant byte address 0x4 - core index']
  #allocation1 [shape = 'u32[144,128]{1,0:T(1,128)}', space=vmem, size = 0x12000, scoped, tag = 'internal scratch']
  #allocation2 [shape = 'f32[8,128]{1,0:T(8,128)}', space=vmem, size = 0x1000, scoped, tag = 'scratch operand']
  #allocation3 [shape = 'f32[1,1]{1,0:T(1,128)S(6)}', space=smem, size = 0x200, scoped, tag = 'scoped memory for tpu_custom_call.1']
  %s0 = inlined_call_operand.<no memory space> [shape: f32[1,1], index: 0, kind: input, shape index: {}]
  %s1 = inlined_call_operand.hbm [shape: f32[8,128], index: 1, kind: input, shape index: {}]
  %s2 = inlined_call_operand.hbm [shape: f32[128,128], index: 2, kind: input, shape index: {}]
  %s3 = inlined_call_operand.vmem [shape: f32[1,128], index: 3, kind: input, shape index: {}]
  %s4 = inlined_call_operand.hbm [shape: f32[8,128], index: 4, kind: output, shape index: {}]
  %s5 = sld [smem:[#allocation0]]
  $region42: #{tpu_custom_call.1} parent=0
    _
  %s7 = ssub.s32 1, %s5
  %s8 = scalar_select 0, %s7, %s5
  %9 = sst [smem:[#allocation3]] %s0
  $region1: #{tpu_custom_call.1} parent=0
    #allocation4 [shape = 'u8[4096]{0}', space=vmem, size = 0x1000, scoped, tag = 'input window, operand 1, single buffered']
    #allocation5 [shape = 's32[1]{0}', space=sflag, size = 0x4, scoped, tag = 'scoped memory for tpu_custom_call.1']
    #allocation6 [shape = 's32[1]{0}', space=sflag, size = 0x4, scoped, tag = 'scoped memory for tpu_custom_call.1']
    #allocation7 [shape = 'u8[65536]{0}', space=vmem, size = 0x10000, scoped, tag = 'input window, operand 2, single buffered']
    #allocation8 [shape = 's32[1]{0}', space=sflag, size = 0x4, scoped, tag = 'scoped memory for tpu_custom_call.1']
    #allocation9 [shape = 'u8[4096]{0}', space=vmem, size = 0x1000, scoped, tag = 'output window, operand 0, single buffered']
    %10 = vsyncpa [#allocation5], 0
    %11 = vsyncpa [#allocation8], 0
    %12 = vsyncpa [#allocation6], 0
    // Predicated region
    $region2: #{tpu_custom_call.1} parent=1 // pred_check
      _
    $region3: #{tpu_custom_call.1} parent=1 // pred_check_branch
      %14 = sbr.rel (0) target = $region5
    $region4: #{tpu_custom_call.1} parent=1 // pred_region
      _
    $region5: #{tpu_custom_call.1} parent=1 // pred_fallthru
      _
    // Predicated region
    $region6: #{tpu_custom_call.1} parent=1 // pred_check
      _
    $region7: #{tpu_custom_call.1} parent=1 // pred_check_branch
      %16 = sbr.rel (0) target = $region9
    $region8: #{tpu_custom_call.1} parent=1 // pred_region
      %s18 = ssub.s32 128, 128
      %19 = vsyncadd [#allocation5], %s18
      %s21 = sshll.u32 [#allocation4], 4
      %s22 = int_to_ptr.vmem [resolvable:$true] %s21
      %24 = dma.hbm_to_vmem [thread:$0]  %s1, 128, %s22, [#allocation5]
    $region9: #{tpu_custom_call.1} parent=1 // pred_fallthru
      _
    // Predicated region
    $region10: #{tpu_custom_call.1} parent=1 // pred_check
      _
    $region11: #{tpu_custom_call.1} parent=1 // pred_check_branch
      %26 = sbr.rel (0) target = $region13
    $region12: #{tpu_custom_call.1} parent=1 // pred_region
      %s28 = ssub.s32 2048, 2048
      %29 = vsyncadd [#allocation8], %s28
      %s30 = sshll.u32 [#allocation7], 4
      %s31 = int_to_ptr.vmem [resolvable:$true] %s30
      %36 = dma.hbm_to_vmem [thread:$0]  %s2, 2048, %s31, [#allocation8], 128, 128, 8
    $region13: #{tpu_custom_call.1} parent=1 // pred_fallthru
      _
    // Predicated region
    $region14: #{tpu_custom_call.1} parent=1 // pred_check
      _
    $region15: #{tpu_custom_call.1} parent=1 // pred_check_branch
      %38 = sbr.rel (0) target = $region17
    $region16: #{tpu_custom_call.1} parent=1 // pred_region
      _
    $region17: #{tpu_custom_call.1} parent=1 // pred_fallthru
      _
    // Predicated region
    $region18: #{tpu_custom_call.1} parent=1 // pred_check
      _
    $region19: #{tpu_custom_call.1} parent=1 // pred_check_branch
      %40 = sbr.rel (0) target = $region21
    $region20: #{tpu_custom_call.1} parent=1 // pred_region
      %41 = dma.done [#allocation5], 128
    $region21: #{tpu_custom_call.1} parent=1 // pred_fallthru
      _
    // Predicated region
    $region22: #{tpu_custom_call.1} parent=1 // pred_check
      _
    $region23: #{tpu_custom_call.1} parent=1 // pred_check_branch
      %43 = sbr.rel (0) target = $region25
    $region24: #{tpu_custom_call.1} parent=1 // pred_region
      %44 = dma.done [#allocation8], 2048
    $region25: #{tpu_custom_call.1} parent=1 // pred_fallthru
      _
    %p45 = scmp.eq.s32.totalorder 0, 0
    // Predicated region
    $region26: #{tpu_custom_call.1} parent=1 // pred_check
      %p46 = pneg %p45
    $region27: #{tpu_custom_call.1} parent=1 // pred_check_branch
      %48 = sbr.rel (%p46) target = $region29
    $region28: #{tpu_custom_call.1} parent=1 // pred_region
      %49 = vst [vmem:[#allocation2] sm:$0xff] 0.0
    $region29: #{tpu_custom_call.1} parent=1 // pred_fallthru
      _
    %s50 = sld [smem:[#allocation3]]
    %v51 = vld [vmem:[#allocation7] sm:$0xff]
    %v52 = vld [vmem:[#allocation7 + $0x8] sm:$0xff]
    %v53 = vld [vmem:[#allocation7 + $0x10] sm:$0xff]
    %v54 = vld [vmem:[#allocation7 + $0x18] sm:$0xff]
    %v55 = vld [vmem:[#allocation7 + $0x20] sm:$0xff]
    %v56 = vld [vmem:[#allocation7 + $0x28] sm:$0xff]
    %v57 = vld [vmem:[#allocation7 + $0x30] sm:$0xff]
    %v58 = vld [vmem:[#allocation7 + $0x38] sm:$0xff]
    %v59 = vld [vmem:[#allocation7 + $0x40] sm:$0xff]
    %v60 = vld [vmem:[#allocation7 + $0x48] sm:$0xff]
    %v61 = vld [vmem:[#allocation7 + $0x50] sm:$0xff]
    %v62 = vld [vmem:[#allocation7 + $0x58] sm:$0xff]
    %v63 = vld [vmem:[#allocation7 + $0x60] sm:$0xff]
    %v64 = vld [vmem:[#allocation7 + $0x68] sm:$0xff]
    %v65 = vld [vmem:[#allocation7 + $0x70] sm:$0xff]
    %v66 = vld [vmem:[#allocation7 + $0x78] sm:$0xff]
    %v67 = vstv %s50
    %vm68 = vcmp.gt.f32.partialorder %v51, %v67
    %vm69 = vcmp.gt.f32.partialorder %v52, %v67
    %vm70 = vcmp.gt.f32.partialorder %v53, %v67
    %vm71 = vcmp.gt.f32.partialorder %v54, %v67
    %vm72 = vcmp.gt.f32.partialorder %v55, %v67
    %vm73 = vcmp.gt.f32.partialorder %v56, %v67
    %vm74 = vcmp.gt.f32.partialorder %v57, %v67
    %vm75 = vcmp.gt.f32.partialorder %v58, %v67
    %vm76 = vcmp.gt.f32.partialorder %v59, %v67
    %vm77 = vcmp.gt.f32.partialorder %v60, %v67
    %vm78 = vcmp.gt.f32.partialorder %v61, %v67
    %vm79 = vcmp.gt.f32.partialorder %v62, %v67
    %vm80 = vcmp.gt.f32.partialorder %v63, %v67
    %vm81 = vcmp.gt.f32.partialorder %v64, %v67
    %vm82 = vcmp.gt.f32.partialorder %v65, %v67
    %vm83 = vcmp.gt.f32.partialorder %v66, %v67
    %s84 = ssub.f32 0.0, %s50
    %v85 = vstv %s84
    %vm86 = vcmp.lt.f32.partialorder %v51, %v85
    %vm87 = vcmp.lt.f32.partialorder %v52, %v85
    %vm88 = vcmp.lt.f32.partialorder %v53, %v85
    %vm89 = vcmp.lt.f32.partialorder %v54, %v85
    %vm90 = vcmp.lt.f32.partialorder %v55, %v85
    %vm91 = vcmp.lt.f32.partialorder %v56, %v85
    %vm92 = vcmp.lt.f32.partialorder %v57, %v85
    %vm93 = vcmp.lt.f32.partialorder %v58, %v85
    %vm94 = vcmp.lt.f32.partialorder %v59, %v85
    %vm95 = vcmp.lt.f32.partialorder %v60, %v85
    %vm96 = vcmp.lt.f32.partialorder %v61, %v85
    %vm97 = vcmp.lt.f32.partialorder %v62, %v85
    %vm98 = vcmp.lt.f32.partialorder %v63, %v85
    %vm99 = vcmp.lt.f32.partialorder %v64, %v85
    %vm100 = vcmp.lt.f32.partialorder %v65, %v85
    %vm101 = vcmp.lt.f32.partialorder %v66, %v85
    %v102 = vsel %vm86, -1.0, 0.0
    %v103 = vsel %vm87, -1.0, 0.0
    %v104 = vsel %vm88, -1.0, 0.0
    %v105 = vsel %vm89, -1.0, 0.0
    %v106 = vsel %vm90, -1.0, 0.0
    %v107 = vsel %vm91, -1.0, 0.0
    %v108 = vsel %vm92, -1.0, 0.0
    %v109 = vsel %vm93, -1.0, 0.0
    %v110 = vsel %vm94, -1.0, 0.0
    %v111 = vsel %vm95, -1.0, 0.0
    %v112 = vsel %vm96, -1.0, 0.0
    %v113 = vsel %vm97, -1.0, 0.0
    %v114 = vsel %vm98, -1.0, 0.0
    %v115 = vsel %vm99, -1.0, 0.0
    %v116 = vsel %vm100, -1.0, 0.0
    %v117 = vsel %vm101, -1.0, 0.0
    %v118 = vsel %vm68, 1.0, %v102
    %v119 = vsel %vm69, 1.0, %v103
    %v120 = vsel %vm70, 1.0, %v104
    %v121 = vsel %vm71, 1.0, %v105
    %v122 = vsel %vm72, 1.0, %v106
    %v123 = vsel %vm73, 1.0, %v107
    %v124 = vsel %vm74, 1.0, %v108
    %v125 = vsel %vm75, 1.0, %v109
    %v126 = vsel %vm76, 1.0, %v110
    %v127 = vsel %vm77, 1.0, %v111
    %v128 = vsel %vm78, 1.0, %v112
    %v129 = vsel %vm79, 1.0, %v113
    %v130 = vsel %vm80, 1.0, %v114
    %v131 = vsel %vm81, 1.0, %v115
    %v132 = vsel %vm82, 1.0, %v116
    %v133 = vsel %vm83, 1.0, %v117
    %v134 = vld [vmem:[#allocation2] sm:$0xff]
    %v135 = vld [vmem:[#allocation4] sm:$0xff]
    %136 = vmatprep.subr.mxu0 0.0
    %137 = vmatpush1.xpose.msra.mxu0 %v118
    %138 = vmatprep.subr.mxu0 0.0
    %139 = vmatpush1.xpose.msra.mxu0 %v119
    %140 = vmatprep.subr.mxu0 0.0
    %141 = vmatpush1.xpose.msra.mxu0 %v120
    %142 = vmatprep.subr.mxu0 0.0
    %143 = vmatpush1.xpose.msra.mxu0 %v121
    %144 = vmatprep.subr.mxu0 0.0
    %145 = vmatpush1.xpose.msra.mxu0 %v122
    %146 = vmatprep.subr.mxu0 0.0
    %147 = vmatpush1.xpose.msra.mxu0 %v123
    %148 = vmatprep.subr.mxu0 0.0
    %149 = vmatpush1.xpose.msra.mxu0 %v124
    %150 = vmatprep.subr.mxu0 0.0
    %151 = vmatpush1.xpose.msra.mxu0 %v125
    %152 = vmatprep.subr.mxu0 0.0
    %153 = vmatpush1.xpose.msra.mxu0 %v126
    %154 = vmatprep.subr.mxu0 0.0
    %155 = vmatpush1.xpose.msra.mxu0 %v127
    %156 = vmatprep.subr.mxu0 0.0
    %157 = vmatpush1.xpose.msra.mxu0 %v128
    %158 = vmatprep.subr.mxu0 0.0
    %159 = vmatpush1.xpose.msra.mxu0 %v129
    %160 = vmatprep.subr.mxu0 0.0
    %161 = vmatpush1.xpose.msra.mxu0 %v130
    %162 = vmatprep.subr.mxu0 0.0
    %163 = vmatpush1.xpose.msra.mxu0 %v131
    %164 = vmatprep.subr.mxu0 0.0
    %165 = vmatpush1.xpose.msra.mxu0 %v132
    %166 = vmatprep.subr.mxu0 0.0
    %167 = vmatpush1.xpose.msra.mxu0 %v133
    %168 = vmatprep.subr.mxu0 0.0
    %169 = vmatpush1.xpose.msra.mxu0 0.0
    %170 = vmatprep.subr.mxu0 0.0
    %171 = vmatpush1.xpose.msra.mxu0 0.0
    %172 = vmatprep.subr.mxu0 0.0
    %173 = vmatpush1.xpose.msra.mxu0 0.0
    %174 = vmatprep.subr.mxu0 0.0
    %175 = vmatpush1.xpose.msra.mxu0 0.0
    %176 = vmatprep.subr.mxu0 0.0
    %177 = vmatpush1.xpose.msra.mxu0 0.0
    %178 = vmatprep.subr.mxu0 0.0
    %179 = vmatpush1.xpose.msra.mxu0 0.0
    %180 = vmatprep.subr.mxu0 0.0
    %181 = vmatpush1.xpose.msra.mxu0 0.0
    %182 = vmatprep.subr.mxu0 0.0
    %183 = vmatpush1.xpose.msra.mxu0 0.0
    %184 = vmatprep.subr.mxu0 0.0
    %185 = vmatpush1.xpose.msra.mxu0 0.0
    %186 = vmatprep.subr.mxu0 0.0
    %187 = vmatpush1.xpose.msra.mxu0 0.0
    %188 = vmatprep.subr.mxu0 0.0
    %189 = vmatpush1.xpose.msra.mxu0 0.0
    %190 = vmatprep.subr.mxu0 0.0
    %191 = vmatpush1.xpose.msra.mxu0 0.0
    %192 = vmatprep.subr.mxu0 0.0
    %193 = vmatpush1.xpose.msra.mxu0 0.0
    %194 = vmatprep.subr.mxu0 0.0
    %195 = vmatpush1.xpose.msra.mxu0 0.0
    %196 = vmatprep.subr.mxu0 0.0
    %197 = vmatpush1.xpose.msra.mxu0 0.0
    %198 = vmatprep.subr.mxu0 0.0
    %199 = vmatpush1.xpose.msra.mxu0 0.0
    %200 = vmatprep.mubr.f32.mxu0 0.0
    %201 = vmatmul.mubr.f32.gmra.mrb[0].mxu0 %v135
    %v202 = vpop.f32.mrb[0].mxu0
    %v203 = vadd.f32 0.0, %v202
    %v204 = vpop.f32.mrb[0].mxu0
    %205 = vdwg.mxu0
    %v206 = vadd.f32 %v134, %v203
    %207 = vst [vmem:[#allocation2] sm:$0xff] %v206
    // Predicated region
    $region30: #{tpu_custom_call.1} parent=1 // pred_check
      %p208 = pneg %p45
    $region31: #{tpu_custom_call.1} parent=1 // pred_check_branch
      %210 = sbr.rel (%p208) target = $region33
    $region32: #{tpu_custom_call.1} parent=1 // pred_region
      %v211 = vld [vmem:[#allocation2] sm:$0xff]
      %v212 = vld [vmem:[%s3] sm:$0x1]
      %v214 = vlaneseq
      %v215 = vshrl.u32 %v214, 7
      %v216 = vsub.s32 0, %v215
      %v217 = vrot.slane %v212, %v216
      %v219 = vadd.f32 %v211, %v217
      %220 = vst [vmem:[#allocation9] sm:$0xff] %v219
    $region33: #{tpu_custom_call.1} parent=1 // pred_fallthru
      _
    // Predicated region
    $region34: #{tpu_custom_call.1} parent=1 // pred_check
      _
    $region35: #{tpu_custom_call.1} parent=1 // pred_check_branch
      %222 = sbr.rel (0) target = $region37
    $region36: #{tpu_custom_call.1} parent=1 // pred_region
      %s224 = ssub.s32 128, 128
      %225 = vsyncadd [#allocation6], %s224
      %s227 = sshll.u32 [#allocation9], 4
      %s228 = int_to_ptr.vmem [resolvable:$true] %s227
      %230 = dma.vmem_to_hbm [thread:$0]  %s228, 128, %s4, [#allocation6]
    $region37: #{tpu_custom_call.1} parent=1 // pred_fallthru
      _
    // Predicated region
    $region38: #{tpu_custom_call.1} parent=1 // pred_check
      _
    $region39: #{tpu_custom_call.1} parent=1 // pred_check_branch
      %232 = sbr.rel (0) target = $region41
    $region40: #{tpu_custom_call.1} parent=1 // pred_region
      %233 = dma.done [#allocation6], 128
    $region41: #{tpu_custom_call.1} parent=1 // pred_fallthru
      _
    %234 = vsyncpa [#allocation5], 1
    %235 = vsyncpa [#allocation8], 1
    %236 = vsyncpa [#allocation6], 1

</llo_original>
